<compile_context>
chip_gen: v6e
topology: v6e:2x2x1
jax: 0.10.0
libtpu: 0.0.40
codegen_flags: <defaults>
</compile_context>

<pallas_src>
import jax
import jax.numpy as jnp
from jax.experimental import pallas as pl
from jax.experimental.pallas import tpu as pltpu


def _round_up(x, m):
    return ((x + m - 1) // m) * m


def actor_kernel(x_ref,
                 w1_ref, b1_ref,
                 w2_ref, b2_ref,
                 w3_ref, b3_ref,
                 w4_ref, b4_ref,
                 o_ref):
    # Layer 1: Linear(n_states, 64) + ReLU  (bf16 matmul, f32 accumulate)
    h = jnp.dot(x_ref[...].astype(jnp.bfloat16), w1_ref[...],
                preferred_element_type=jnp.float32)
    h = jnp.maximum(h + b1_ref[...], 0.0)
    # Layer 2: Linear(64, 128) + ReLU
    h = jnp.dot(h.astype(jnp.bfloat16), w2_ref[...],
                preferred_element_type=jnp.float32)
    h = jnp.maximum(h + b2_ref[...], 0.0)
    # Layer 3: Linear(128, 64) + ReLU
    h = jnp.dot(h.astype(jnp.bfloat16), w3_ref[...],
                preferred_element_type=jnp.float32)
    h = jnp.maximum(h + b3_ref[...], 0.0)
    # Layer 4: Linear(64, n_actions_padded) + Tanh
    h = jnp.dot(h.astype(jnp.bfloat16), w4_ref[...],
                preferred_element_type=jnp.float32)
    o_ref[...] = jnp.tanh(h + b4_ref[...]).astype(o_ref.dtype)


def actor_forward(state, params, *, tile_b=512):
    """state: (B, n_states) f32. params: dict of (in, out) weights and (1, out) biases."""
    B, n_states = state.shape
    n_actions = params["w4"].shape[1]

    # Lane-dense output: pad action dim up to a multiple of 128.
    out_pad = _round_up(max(n_actions, 1), 128)

    # Batch tile: large (512) when the batch is big, otherwise just round the
    # batch up to a sublane multiple so tiny batches still run with grid=1.
    tile_b = min(tile_b, max(8, _round_up(B, 8)))
    b_pad = _round_up(B, tile_b)

    # bf16 weights for the MXU, f32 biases for the VPU epilogue.
    w1 = params["w1"].astype(jnp.bfloat16)
    w2 = params["w2"].astype(jnp.bfloat16)
    w3 = params["w3"].astype(jnp.bfloat16)
    w4 = jnp.pad(params["w4"], ((0, 0), (0, out_pad - n_actions))).astype(jnp.bfloat16)
    b1 = params["b1"].astype(jnp.float32)
    b2 = params["b2"].astype(jnp.float32)
    b3 = params["b3"].astype(jnp.float32)
    b4 = jnp.pad(params["b4"], ((0, 0), (0, out_pad - n_actions))).astype(jnp.float32)

    x = state.astype(jnp.float32)
    if b_pad != B:
        x = jnp.pad(x, ((0, b_pad - B), (0, 0)))

    grid = (b_pad // tile_b,)

    def resident(arr):
        # Full-array block, same block every grid step -> stays VMEM-resident.
        return pl.BlockSpec(arr.shape, lambda i: (0, 0))

    flops = 2 * b_pad * (n_states * 64 + 64 * 128 + 128 * 64 + 64 * out_pad)
    bytes_accessed = (
        b_pad * n_states * 4 + b_pad * out_pad * 4
        + sum(int(w.size) * 2 for w in (w1, w2, w3, w4))
        + sum(int(b.size) * 4 for b in (b1, b2, b3, b4)))

    out = pl.pallas_call(
        actor_kernel,
        out_shape=jax.ShapeDtypeStruct((b_pad, out_pad), jnp.float32),
        grid=grid,
        in_specs=[
            pl.BlockSpec((tile_b, n_states), lambda i: (i, 0)),
            resident(w1), resident(b1),
            resident(w2), resident(b2),
            resident(w3), resident(b3),
            resident(w4), resident(b4),
        ],
        out_specs=pl.BlockSpec((tile_b, out_pad), lambda i: (i, 0)),
        compiler_params=pltpu.CompilerParams(
            dimension_semantics=("parallel",)),
        cost_estimate=pl.CostEstimate(
            flops=flops,
            transcendentals=b_pad * out_pad,
            bytes_accessed=bytes_accessed),
    )(x, w1, b1, w2, b2, w3, b3, w4, b4)

    return out[:B, :n_actions]


def init_actor_params(key, n_states, n_actions):
    """Deterministic init mimicking PyTorch Linear default (U[-1/sqrt(in), 1/sqrt(in)])."""
    dims = [(n_states, 64), (64, 128), (128, 64), (64, n_actions)]
    params = {}
    for i, (d_in, d_out) in enumerate(dims, start=1):
        key, kw, kb = jax.random.split(key, 3)
        bound = 1.0 / jnp.sqrt(float(d_in))
        # Stored as (in, out): transpose of PyTorch's (out, in) layout.
        params[f"w{i}"] = jax.random.uniform(
            kw, (d_in, d_out), jnp.float32, -bound, bound)
        # Bias kept 2-D (1, out) so it lives naturally on VMEM lanes.
        params[f"b{i}"] = jax.random.uniform(
            kb, (1, d_out), jnp.float32, -bound, bound)
    return params


def actor_reference(state, params):
    """Reference with the same bf16-matmul / f32-accumulate numerics as the kernel."""
    def dense(x, w, b):
        return jnp.dot(x.astype(jnp.bfloat16), w.astype(jnp.bfloat16),
                       preferred_element_type=jnp.float32) + b
    h = jnp.maximum(dense(state, params["w1"], params["b1"]), 0.0)
    h = jnp.maximum(dense(h, params["w2"], params["b2"]), 0.0)
    h = jnp.maximum(dense(h, params["w3"], params["b3"]), 0.0)
    return jnp.tanh(dense(h, params["w4"], params["b4"]))


if __name__ == "__main__":
    key = jax.random.PRNGKey(0)
    n_states, n_actions, batch = 16, 8, 70   # ragged batch: exercises grid + padding

    k_params, k_state = jax.random.split(key)
    params = init_actor_params(k_params, n_states, n_actions)
    state = jax.random.normal(k_state, (batch, n_states), jnp.float32)

    # Small tile so the demo runs multiple grid steps (70 -> padded to 96, grid=3).
    out = jax.block_until_ready(actor_forward(state, params, tile_b=32))
    ref = jax.block_until_ready(actor_reference(state, params))

    assert out.shape == (batch, n_actions)
    assert jnp.allclose(out, ref, atol=2e-3, rtol=2e-3), float(jnp.abs(out - ref).max())
    print("KERNEL_OK")
</pallas_src>

<mosaic_0001>
module attributes {stable_mosaic.version = 11 : i64} {
  func.func @actor_kernel(%arg0: i32, %arg1: memref<32x16xf32, #tpu.memory_space<vmem>>, %arg2: memref<16x64xbf16, #tpu.memory_space<vmem>>, %arg3: memref<1x64xf32, #tpu.memory_space<vmem>>, %arg4: memref<64x128xbf16, #tpu.memory_space<vmem>>, %arg5: memref<1x128xf32, #tpu.memory_space<vmem>>, %arg6: memref<128x64xbf16, #tpu.memory_space<vmem>>, %arg7: memref<1x64xf32, #tpu.memory_space<vmem>>, %arg8: memref<64x128xbf16, #tpu.memory_space<vmem>>, %arg9: memref<1x128xf32, #tpu.memory_space<vmem>>, %arg10: memref<32x128xf32, #tpu.memory_space<vmem>>) attributes {dimension_semantics = [#tpu.dimension_semantics<parallel>], iteration_bounds = array<i64: 3>, scalar_prefetch = 0 : i64, scratch_operands = 0 : i64, tpu.core_type = #tpu.core_type<tc>, window_params = [{transform_indices = @transform_0, window_bounds = array<i64: 32, 16>}, {pipeline_mode = #tpu.pipeline_mode<synchronous>, transform_indices = @transform_1, window_bounds = array<i64: 16, 64>}, {pipeline_mode = #tpu.pipeline_mode<synchronous>, transform_indices = @transform_2, window_bounds = array<i64: 1, 64>}, {pipeline_mode = #tpu.pipeline_mode<synchronous>, transform_indices = @transform_3, window_bounds = array<i64: 64, 128>}, {pipeline_mode = #tpu.pipeline_mode<synchronous>, transform_indices = @transform_4, window_bounds = array<i64: 1, 128>}, {pipeline_mode = #tpu.pipeline_mode<synchronous>, transform_indices = @transform_5, window_bounds = array<i64: 128, 64>}, {pipeline_mode = #tpu.pipeline_mode<synchronous>, transform_indices = @transform_6, window_bounds = array<i64: 1, 64>}, {pipeline_mode = #tpu.pipeline_mode<synchronous>, transform_indices = @transform_7, window_bounds = array<i64: 64, 128>}, {pipeline_mode = #tpu.pipeline_mode<synchronous>, transform_indices = @transform_8, window_bounds = array<i64: 1, 128>}, {transform_indices = @transform_9, window_bounds = array<i64: 32, 128>}]} {
    %c0 = arith.constant 0 : index
    %c0_0 = arith.constant 0 : index
    %0 = vector.load %arg1[%c0, %c0_0] : memref<32x16xf32, #tpu.memory_space<vmem>>, vector<32x16xf32>
    %1 = arith.truncf %0 : vector<32x16xf32> to vector<32x16xbf16>
    %c0_1 = arith.constant 0 : index
    %c0_2 = arith.constant 0 : index
    %2 = vector.load %arg2[%c0_1, %c0_2] : memref<16x64xbf16, #tpu.memory_space<vmem>>, vector<16x64xbf16>
    %cst = arith.constant dense<0.000000e+00> : vector<32x64xf32>
    %3 = tpu.matmul %1, %2, %cst {dimension_numbers = #tpu.dot_dimension_numbers<[1], [0], [0], [1], [0, 0, 1, 1], [], []>} : vector<32x16xbf16>, vector<16x64xbf16>, vector<32x64xf32> -> vector<32x64xf32>
    %c0_3 = arith.constant 0 : index
    %c0_4 = arith.constant 0 : index
    %4 = vector.load %arg3[%c0_3, %c0_4] : memref<1x64xf32, #tpu.memory_space<vmem>>, vector<1x64xf32>
    %5 = vector.broadcast %4 : vector<1x64xf32> to vector<32x64xf32>
    %6 = arith.addf %3, %5 : vector<32x64xf32>
    %cst_5 = arith.constant 0.000000e+00 : f32
    %7 = vector.broadcast %cst_5 : f32 to vector<32x64xf32>
    %8 = arith.maximumf %6, %7 : vector<32x64xf32>
    %9 = arith.truncf %8 : vector<32x64xf32> to vector<32x64xbf16>
    %c0_6 = arith.constant 0 : index
    %c0_7 = arith.constant 0 : index
    %10 = vector.load %arg4[%c0_6, %c0_7] : memref<64x128xbf16, #tpu.memory_space<vmem>>, vector<64x128xbf16>
    %cst_8 = arith.constant dense<0.000000e+00> : vector<32x128xf32>
    %11 = tpu.matmul %9, %10, %cst_8 {dimension_numbers = #tpu.dot_dimension_numbers<[1], [0], [0], [1], [0, 0, 1, 1], [], []>} : vector<32x64xbf16>, vector<64x128xbf16>, vector<32x128xf32> -> vector<32x128xf32>
    %c0_9 = arith.constant 0 : index
    %c0_10 = arith.constant 0 : index
    %12 = vector.load %arg5[%c0_9, %c0_10] : memref<1x128xf32, #tpu.memory_space<vmem>>, vector<1x128xf32>
    %13 = vector.broadcast %12 : vector<1x128xf32> to vector<32x128xf32>
    %14 = arith.addf %11, %13 : vector<32x128xf32>
    %cst_11 = arith.constant 0.000000e+00 : f32
    %15 = vector.broadcast %cst_11 : f32 to vector<32x128xf32>
    %16 = arith.maximumf %14, %15 : vector<32x128xf32>
    %17 = arith.truncf %16 : vector<32x128xf32> to vector<32x128xbf16>
    %c0_12 = arith.constant 0 : index
    %c0_13 = arith.constant 0 : index
    %18 = vector.load %arg6[%c0_12, %c0_13] : memref<128x64xbf16, #tpu.memory_space<vmem>>, vector<128x64xbf16>
    %cst_14 = arith.constant dense<0.000000e+00> : vector<32x64xf32>
    %19 = tpu.matmul %17, %18, %cst_14 {dimension_numbers = #tpu.dot_dimension_numbers<[1], [0], [0], [1], [0, 0, 1, 1], [], []>} : vector<32x128xbf16>, vector<128x64xbf16>, vector<32x64xf32> -> vector<32x64xf32>
    %c0_15 = arith.constant 0 : index
    %c0_16 = arith.constant 0 : index
    %20 = vector.load %arg7[%c0_15, %c0_16] : memref<1x64xf32, #tpu.memory_space<vmem>>, vector<1x64xf32>
    %21 = vector.broadcast %20 : vector<1x64xf32> to vector<32x64xf32>
    %22 = arith.addf %19, %21 : vector<32x64xf32>
    %cst_17 = arith.constant 0.000000e+00 : f32
    %23 = vector.broadcast %cst_17 : f32 to vector<32x64xf32>
    %24 = arith.maximumf %22, %23 : vector<32x64xf32>
    %25 = arith.truncf %24 : vector<32x64xf32> to vector<32x64xbf16>
    %c0_18 = arith.constant 0 : index
    %c0_19 = arith.constant 0 : index
    %26 = vector.load %arg8[%c0_18, %c0_19] : memref<64x128xbf16, #tpu.memory_space<vmem>>, vector<64x128xbf16>
    %cst_20 = arith.constant dense<0.000000e+00> : vector<32x128xf32>
    %27 = tpu.matmul %25, %26, %cst_20 {dimension_numbers = #tpu.dot_dimension_numbers<[1], [0], [0], [1], [0, 0, 1, 1], [], []>} : vector<32x64xbf16>, vector<64x128xbf16>, vector<32x128xf32> -> vector<32x128xf32>
    %c0_21 = arith.constant 0 : index
    %c0_22 = arith.constant 0 : index
    %28 = vector.load %arg9[%c0_21, %c0_22] : memref<1x128xf32, #tpu.memory_space<vmem>>, vector<1x128xf32>
    %29 = vector.broadcast %28 : vector<1x128xf32> to vector<32x128xf32>
    %30 = arith.addf %27, %29 : vector<32x128xf32>
    %31 = math.tanh %30 : vector<32x128xf32>
    %c0_23 = arith.constant 0 : index
    %c0_24 = arith.constant 0 : index
    %32 = vector.load %arg10[%c0_23, %c0_24] : memref<32x128xf32, #tpu.memory_space<vmem>>, vector<32x128xf32>
    tpu.vector_store %arg10[%c0_23, %c0_24], %31 {strides = array<i32>} : memref<32x128xf32, #tpu.memory_space<vmem>>, vector<32x128xf32>,
    return
  }
  func.func @transform_0(%arg0: i32) -> (i32, i32) {
    %c0_i32 = arith.constant 0 : i32
    %c0_i32_0 = arith.constant 0 : i32
    return %arg0, %c0_i32 : i32, i32
  }
  func.func @transform_1(%arg0: i32) -> (i32, i32) {
    %c0_i32 = arith.constant 0 : i32
    %c0_i32_0 = arith.constant 0 : i32
    %c0_i32_1 = arith.constant 0 : i32
    return %c0_i32, %c0_i32_0 : i32, i32
  }
  func.func @transform_2(%arg0: i32) -> (i32, i32) {
    %c0_i32 = arith.constant 0 : i32
    %c0_i32_0 = arith.constant 0 : i32
    %c0_i32_1 = arith.constant 0 : i32
    return %c0_i32, %c0_i32_0 : i32, i32
  }
  func.func @transform_3(%arg0: i32) -> (i32, i32) {
    %c0_i32 = arith.constant 0 : i32
    %c0_i32_0 = arith.constant 0 : i32
    %c0_i32_1 = arith.constant 0 : i32
    return %c0_i32, %c0_i32_0 : i32, i32
  }
  func.func @transform_4(%arg0: i32) -> (i32, i32) {
    %c0_i32 = arith.constant 0 : i32
    %c0_i32_0 = arith.constant 0 : i32
    %c0_i32_1 = arith.constant 0 : i32
    return %c0_i32, %c0_i32_0 : i32, i32
  }
  func.func @transform_5(%arg0: i32) -> (i32, i32) {
    %c0_i32 = arith.constant 0 : i32
    %c0_i32_0 = arith.constant 0 : i32
    %c0_i32_1 = arith.constant 0 : i32
    return %c0_i32, %c0_i32_0 : i32, i32
  }
  func.func @transform_6(%arg0: i32) -> (i32, i32) {
    %c0_i32 = arith.constant 0 : i32
    %c0_i32_0 = arith.constant 0 : i32
    %c0_i32_1 = arith.constant 0 : i32
    return %c0_i32, %c0_i32_0 : i32, i32
  }
  func.func @transform_7(%arg0: i32) -> (i32, i32) {
    %c0_i32 = arith.constant 0 : i32
    %c0_i32_0 = arith.constant 0 : i32
    %c0_i32_1 = arith.constant 0 : i32
    return %c0_i32, %c0_i32_0 : i32, i32
  }
  func.func @transform_8(%arg0: i32) -> (i32, i32) {
    %c0_i32 = arith.constant 0 : i32
    %c0_i32_0 = arith.constant 0 : i32
    %c0_i32_1 = arith.constant 0 : i32
    return %c0_i32, %c0_i32_0 : i32, i32
  }
  func.func @transform_9(%arg0: i32) -> (i32, i32) {
    %c0_i32 = arith.constant 0 : i32
    %c0_i32_0 = arith.constant 0 : i32
    return %arg0, %c0_i32 : i32, i32
  }
}

</mosaic_0001>

<llo_original>
// kernel: tpu_custom_call.1
$region0: #{tpu_custom_call.1}
  #allocation0 [shape = 'u32[]', space=smem, size = 0x4, offset = 0x4, fixed_abs, tag = 'smem constant byte address 0x4 - core index']
  #allocation1 [shape = 'u32[144,128]{1,0:T(1,128)}', space=vmem, size = 0x12000, scoped, tag = 'internal scratch']
  %s0 = inlined_call_operand.vmem [shape: f32[96,16], index: 0, kind: input, shape index: {}]
  %s1 = inlined_call_operand.vmem [shape: bf16[16,64], index: 1, kind: input, shape index: {}]
  %s2 = inlined_call_operand.vmem [shape: f32[1,64], index: 2, kind: input, shape index: {}]
  %s3 = inlined_call_operand.vmem [shape: bf16[64,128], index: 3, kind: input, shape index: {}]
  %s4 = inlined_call_operand.vmem [shape: f32[1,128], index: 4, kind: input, shape index: {}]
  %s5 = inlined_call_operand.vmem [shape: bf16[128,64], index: 5, kind: input, shape index: {}]
  %s6 = inlined_call_operand.vmem [shape: f32[1,64], index: 6, kind: input, shape index: {}]
  %s7 = inlined_call_operand.vmem [shape: bf16[64,128], index: 7, kind: input, shape index: {}]
  %s8 = inlined_call_operand.vmem [shape: f32[1,128], index: 8, kind: input, shape index: {}]
  %s9 = inlined_call_operand.hbm [shape: f32[96,128], index: 9, kind: output, shape index: {}]
  %s10 = sld [smem:[#allocation0]]
  $region69: #{tpu_custom_call.1} parent=0
    _
  %s12 = ssub.s32 1, %s10
  %s13 = scalar_select 0, %s12, %s10
  $region1: #{tpu_custom_call.1} parent=0
    #allocation2 [shape = 'u8[32768]{0}', space=vmem, size = 0x8000, scoped, tag = 'output window, operand 0']
    #allocation3 [shape = 's32[2]{0}', space=sflag, size = 0x8, scoped, tag = 'scoped memory for tpu_custom_call.1']
    %14 = vsyncpa [#allocation3], 0
    %s15 = scalar_lea.sflag [#allocation3], 1
    %16 = vsyncpa %s15, 0
    loop: start=0, step=1, limit=5
    $region2: #{tpu_custom_call.1} parent=1 // loop_pre_header
      _
    $region3: #{tpu_custom_call.1} parent=1 // loop_header
      %s18 = sphi 0, %s22
      %p19 = scmp.ge.s32.totalorder %s18, 5
      %s28 = sphi 0, %s30
      %s31 = sphi 0, %s28
      %s32 = sphi 0, %s31
      %s48 = sphi 0, %s32
      %s52 = sphi 0, %s52
      %s54 = sphi 0, %s52
      %s55 = sphi 0, %s54
      %s69 = sphi 0, %s55
      %s73 = sphi 0, %s73
      %s75 = sphi 0, %s73
      %s76 = sphi 0, %s75
      %s90 = sphi 0, %s76
      %s94 = sphi 0, %s94
      %s96 = sphi 0, %s94
      %s97 = sphi 0, %s96
      %s111 = sphi 0, %s97
      %s115 = sphi 0, %s115
      %s117 = sphi 0, %s115
      %s118 = sphi 0, %s117
      %s132 = sphi 0, %s118
      %s136 = sphi 0, %s136
      %s138 = sphi 0, %s136
      %s139 = sphi 0, %s138
      %s153 = sphi 0, %s139
      %s157 = sphi 0, %s157
      %s159 = sphi 0, %s157
      %s160 = sphi 0, %s159
      %s174 = sphi 0, %s160
      %s178 = sphi 0, %s178
      %s180 = sphi 0, %s178
      %s181 = sphi 0, %s180
      %s195 = sphi 0, %s181
      %s199 = sphi 0, %s199
      %s201 = sphi 0, %s199
      %s202 = sphi 0, %s201
      %s216 = sphi 0, %s202
      %s222 = sphi 0, %s224
      %s225 = sphi 0, %s222
      %s226 = sphi 0, %s225
      %s242 = sphi 0, %s226
    $region4: #{tpu_custom_call.1} parent=1 // loop_header_branch
      %21 = sbr.rel (%p19) target = $region8
    $region5: #{tpu_custom_call.1} parent=1 // loop_body
      %s23 = ssub.s32 %s18, 1
      %s24 = ssub.s32 %s18, 2
      %s25 = sadd.s32 %s18, 1
      %s26 = ssub.s32 %s18, %s25
      %p27 = scmp.eq.s32.totalorder %s26, 0
      %s29 = sadd.s32 %s28, 1
      %s30 = scalar_select %p27, %s28, %s29
      %p33 = pneg %p27
      %p34 = scmp.eq.s32.totalorder %s18, 2
      %p35 = por %p33, %p34
      %p36 = scmp.ne.s32.totalorder %s28, %s31
      %p37 = scmp.eq.s32.totalorder %s18, 0
      %p38 = por %p36, %p37
      %p39 = scmp.ne.s32.totalorder %s28, %s31
      %p40 = scmp.eq.s32.totalorder %s23, 2
      %p41 = por %p39, %p40
      %p42 = scmp.ne.s32.totalorder %s31, %s32
      %p43 = scmp.eq.s32.totalorder %s23, 0
      %p44 = por %p42, %p43
      %p45 = scmp.ne.s32.totalorder %s31, %s32
      %p46 = scmp.eq.s32.totalorder %s24, 2
      %p47 = por %p45, %p46
      %p49 = scmp.ne.s32.totalorder %s32, %s48
      %p50 = scmp.eq.s32.totalorder %s24, 0
      %p51 = por %p49, %p50
      %s53 = sadd.s32 %s52, 1
      %p56 = scmp.eq.s32.totalorder %s18, 2
      %p57 = scmp.ne.s32.totalorder %s52, %s54
      %p58 = scmp.eq.s32.totalorder %s18, 0
      %p59 = por %p57, %p58
      %p60 = scmp.ne.s32.totalorder %s52, %s54
      %p61 = scmp.eq.s32.totalorder %s23, 2
      %p62 = por %p60, %p61
      %p63 = scmp.ne.s32.totalorder %s54, %s55
      %p64 = scmp.eq.s32.totalorder %s23, 0
      %p65 = por %p63, %p64
      %p66 = scmp.ne.s32.totalorder %s54, %s55
      %p67 = scmp.eq.s32.totalorder %s24, 2
      %p68 = por %p66, %p67
      %p70 = scmp.ne.s32.totalorder %s55, %s69
      %p71 = scmp.eq.s32.totalorder %s24, 0
      %p72 = por %p70, %p71
      %s74 = sadd.s32 %s73, 1
      %p77 = scmp.eq.s32.totalorder %s18, 2
      %p78 = scmp.ne.s32.totalorder %s73, %s75
      %p79 = scmp.eq.s32.totalorder %s18, 0
      %p80 = por %p78, %p79
      %p81 = scmp.ne.s32.totalorder %s73, %s75
      %p82 = scmp.eq.s32.totalorder %s23, 2
      %p83 = por %p81, %p82
      %p84 = scmp.ne.s32.totalorder %s75, %s76
      %p85 = scmp.eq.s32.totalorder %s23, 0
      %p86 = por %p84, %p85
      %p87 = scmp.ne.s32.totalorder %s75, %s76
      %p88 = scmp.eq.s32.totalorder %s24, 2
      %p89 = por %p87, %p88
      %p91 = scmp.ne.s32.totalorder %s76, %s90
      %p92 = scmp.eq.s32.totalorder %s24, 0
      %p93 = por %p91, %p92
      %s95 = sadd.s32 %s94, 1
      %p98 = scmp.eq.s32.totalorder %s18, 2
      %p99 = scmp.ne.s32.totalorder %s94, %s96
      %p100 = scmp.eq.s32.totalorder %s18, 0
      %p101 = por %p99, %p100
      %p102 = scmp.ne.s32.totalorder %s94, %s96
      %p103 = scmp.eq.s32.totalorder %s23, 2
      %p104 = por %p102, %p103
      %p105 = scmp.ne.s32.totalorder %s96, %s97
      %p106 = scmp.eq.s32.totalorder %s23, 0
      %p107 = por %p105, %p106
      %p108 = scmp.ne.s32.totalorder %s96, %s97
      %p109 = scmp.eq.s32.totalorder %s24, 2
      %p110 = por %p108, %p109
      %p112 = scmp.ne.s32.totalorder %s97, %s111
      %p113 = scmp.eq.s32.totalorder %s24, 0
      %p114 = por %p112, %p113
      %s116 = sadd.s32 %s115, 1
      %p119 = scmp.eq.s32.totalorder %s18, 2
      %p120 = scmp.ne.s32.totalorder %s115, %s117
      %p121 = scmp.eq.s32.totalorder %s18, 0
      %p122 = por %p120, %p121
      %p123 = scmp.ne.s32.totalorder %s115, %s117
      %p124 = scmp.eq.s32.totalorder %s23, 2
      %p125 = por %p123, %p124
      %p126 = scmp.ne.s32.totalorder %s117, %s118
      %p127 = scmp.eq.s32.totalorder %s23, 0
      %p128 = por %p126, %p127
      %p129 = scmp.ne.s32.totalorder %s117, %s118
      %p130 = scmp.eq.s32.totalorder %s24, 2
      %p131 = por %p129, %p130
      %p133 = scmp.ne.s32.totalorder %s118, %s132
      %p134 = scmp.eq.s32.totalorder %s24, 0
      %p135 = por %p133, %p134
      %s137 = sadd.s32 %s136, 1
      %p140 = scmp.eq.s32.totalorder %s18, 2
      %p141 = scmp.ne.s32.totalorder %s136, %s138
      %p142 = scmp.eq.s32.totalorder %s18, 0
      %p143 = por %p141, %p142
      %p144 = scmp.ne.s32.totalorder %s136, %s138
      %p145 = scmp.eq.s32.totalorder %s23, 2
      %p146 = por %p144, %p145
      %p147 = scmp.ne.s32.totalorder %s138, %s139
      %p148 = scmp.eq.s32.totalorder %s23, 0
      %p149 = por %p147, %p148
      %p150 = scmp.ne.s32.totalorder %s138, %s139
      %p151 = scmp.eq.s32.totalorder %s24, 2
      %p152 = por %p150, %p151
      %p154 = scmp.ne.s32.totalorder %s139, %s153
      %p155 = scmp.eq.s32.totalorder %s24, 0
      %p156 = por %p154, %p155
      %s158 = sadd.s32 %s157, 1
      %p161 = scmp.eq.s32.totalorder %s18, 2
      %p162 = scmp.ne.s32.totalorder %s157, %s159
      %p163 = scmp.eq.s32.totalorder %s18, 0
      %p164 = por %p162, %p163
      %p165 = scmp.ne.s32.totalorder %s157, %s159
      %p166 = scmp.eq.s32.totalorder %s23, 2
      %p167 = por %p165, %p166
      %p168 = scmp.ne.s32.totalorder %s159, %s160
      %p169 = scmp.eq.s32.totalorder %s23, 0
      %p170 = por %p168, %p169
      %p171 = scmp.ne.s32.totalorder %s159, %s160
      %p172 = scmp.eq.s32.totalorder %s24, 2
      %p173 = por %p171, %p172
      %p175 = scmp.ne.s32.totalorder %s160, %s174
      %p176 = scmp.eq.s32.totalorder %s24, 0
      %p177 = por %p175, %p176
      %s179 = sadd.s32 %s178, 1
      %p182 = scmp.eq.s32.totalorder %s18, 2
      %p183 = scmp.ne.s32.totalorder %s178, %s180
      %p184 = scmp.eq.s32.totalorder %s18, 0
      %p185 = por %p183, %p184
      %p186 = scmp.ne.s32.totalorder %s178, %s180
      %p187 = scmp.eq.s32.totalorder %s23, 2
      %p188 = por %p186, %p187
      %p189 = scmp.ne.s32.totalorder %s180, %s181
      %p190 = scmp.eq.s32.totalorder %s23, 0
      %p191 = por %p189, %p190
      %p192 = scmp.ne.s32.totalorder %s180, %s181
      %p193 = scmp.eq.s32.totalorder %s24, 2
      %p194 = por %p192, %p193
      %p196 = scmp.ne.s32.totalorder %s181, %s195
      %p197 = scmp.eq.s32.totalorder %s24, 0
      %p198 = por %p196, %p197
      %s200 = sadd.s32 %s199, 1
      %p203 = scmp.eq.s32.totalorder %s18, 2
      %p204 = scmp.ne.s32.totalorder %s199, %s201
      %p205 = scmp.eq.s32.totalorder %s18, 0
      %p206 = por %p204, %p205
      %p207 = scmp.ne.s32.totalorder %s199, %s201
      %p208 = scmp.eq.s32.totalorder %s23, 2
      %p209 = por %p207, %p208
      %p210 = scmp.ne.s32.totalorder %s201, %s202
      %p211 = scmp.eq.s32.totalorder %s23, 0
      %p212 = por %p210, %p211
      %p213 = scmp.ne.s32.totalorder %s201, %s202
      %p214 = scmp.eq.s32.totalorder %s24, 2
      %p215 = por %p213, %p214
      %p217 = scmp.ne.s32.totalorder %s202, %s216
      %p218 = scmp.eq.s32.totalorder %s24, 0
      %p219 = por %p217, %p218
      %s220 = ssub.s32 %s18, %s25
      %p221 = scmp.eq.s32.totalorder %s220, 0
      %s223 = sadd.s32 %s222, 1
      %s224 = scalar_select %p221, %s222, %s223
      %p227 = pneg %p221
      %p228 = scmp.eq.s32.totalorder %s18, 2
      %p229 = por %p227, %p228
      %p230 = scmp.ne.s32.totalorder %s222, %s225
      %p231 = scmp.eq.s32.totalorder %s18, 0
      %p232 = por %p230, %p231
      %p233 = scmp.ne.s32.totalorder %s222, %s225
      %p234 = scmp.eq.s32.totalorder %s23, 2
      %p235 = por %p233, %p234
      %p236 = scmp.ne.s32.totalorder %s225, %s226
      %p237 = scmp.eq.s32.totalorder %s23, 0
      %p238 = por %p236, %p237
      %p239 = scmp.ne.s32.totalorder %s225, %s226
      %p240 = scmp.eq.s32.totalorder %s24, 2
      %p241 = por %p239, %p240
      %p243 = scmp.ne.s32.totalorder %s226, %s242
      %p244 = scmp.eq.s32.totalorder %s24, 0
      %p245 = por %p243, %p244
      %p246 = scmp.le.s32.totalorder 1, %s18
      %p247 = scmp.lt.s32.totalorder %s18, 4
      %p248 = pnand %p246, %p247
      %p249 = pneg %p248
      // Predicated region
      $region9: #{tpu_custom_call.1} parent=5 // pred_check
        _
      $region10: #{tpu_custom_call.1} parent=5 // pred_check_branch
        %251 = sbr.rel (%p248) target = $region12
      $region11: #{tpu_custom_call.1} parent=5 // pred_region
        %s252 = ssub.s32 %s18, 1
        // Predicated region
        $region13: #{tpu_custom_call.1} parent=11 // pred_check
          %p253 = pneg %p65
        $region14: #{tpu_custom_call.1} parent=11 // pred_check_branch
          %255 = sbr.rel (%p253) target = $region16
        $region15: #{tpu_custom_call.1} parent=11 // pred_region
          _
        $region16: #{tpu_custom_call.1} parent=11 // pred_fallthru
          _
        // Predicated region
        $region17: #{tpu_custom_call.1} parent=11 // pred_check
          %p256 = pneg %p86
        $region18: #{tpu_custom_call.1} parent=11 // pred_check_branch
          %258 = sbr.rel (%p256) target = $region20
        $region19: #{tpu_custom_call.1} parent=11 // pred_region
          _
        $region20: #{tpu_custom_call.1} parent=11 // pred_fallthru
          _
        // Predicated region
        $region21: #{tpu_custom_call.1} parent=11 // pred_check
          %p259 = pneg %p107
        $region22: #{tpu_custom_call.1} parent=11 // pred_check_branch
          %261 = sbr.rel (%p259) target = $region24
        $region23: #{tpu_custom_call.1} parent=11 // pred_region
          _
        $region24: #{tpu_custom_call.1} parent=11 // pred_fallthru
          _
        // Predicated region
        $region25: #{tpu_custom_call.1} parent=11 // pred_check
          %p262 = pneg %p128
        $region26: #{tpu_custom_call.1} parent=11 // pred_check_branch
          %264 = sbr.rel (%p262) target = $region28
        $region27: #{tpu_custom_call.1} parent=11 // pred_region
          _
        $region28: #{tpu_custom_call.1} parent=11 // pred_fallthru
          _
        // Predicated region
        $region29: #{tpu_custom_call.1} parent=11 // pred_check
          %p265 = pneg %p149
        $region30: #{tpu_custom_call.1} parent=11 // pred_check_branch
          %267 = sbr.rel (%p265) target = $region32
        $region31: #{tpu_custom_call.1} parent=11 // pred_region
          _
        $region32: #{tpu_custom_call.1} parent=11 // pred_fallthru
          _
        // Predicated region
        $region33: #{tpu_custom_call.1} parent=11 // pred_check
          %p268 = pneg %p170
        $region34: #{tpu_custom_call.1} parent=11 // pred_check_branch
          %270 = sbr.rel (%p268) target = $region36
        $region35: #{tpu_custom_call.1} parent=11 // pred_region
          _
        $region36: #{tpu_custom_call.1} parent=11 // pred_fallthru
          _
        // Predicated region
        $region37: #{tpu_custom_call.1} parent=11 // pred_check
          %p271 = pneg %p191
        $region38: #{tpu_custom_call.1} parent=11 // pred_check_branch
          %273 = sbr.rel (%p271) target = $region40
        $region39: #{tpu_custom_call.1} parent=11 // pred_region
          _
        $region40: #{tpu_custom_call.1} parent=11 // pred_fallthru
          _
        // Predicated region
        $region41: #{tpu_custom_call.1} parent=11 // pred_check
          %p274 = pneg %p212
        $region42: #{tpu_custom_call.1} parent=11 // pred_check_branch
          %276 = sbr.rel (%p274) target = $region44
        $region43: #{tpu_custom_call.1} parent=11 // pred_region
          _
        $region44: #{tpu_custom_call.1} parent=11 // pred_fallthru
          _
      $region12: #{tpu_custom_call.1} parent=5 // pred_fallthru
        _
      %p277 = scmp.lt.s32.totalorder %s18, 3
      // Predicated region
      $region45: #{tpu_custom_call.1} parent=5 // pred_check
        %p278 = pneg %p277
      $region46: #{tpu_custom_call.1} parent=5 // pred_check_branch
        %280 = sbr.rel (%p278) target = $region48
      $region47: #{tpu_custom_call.1} parent=5 // pred_region
        // Predicated region
        $region49: #{tpu_custom_call.1} parent=47 // pred_check
          %p281 = pneg %p38
        $region50: #{tpu_custom_call.1} parent=47 // pred_check_branch
          %283 = sbr.rel (%p281) target = $region52
        $region51: #{tpu_custom_call.1} parent=47 // pred_region
          %s284 = smul.u32 4, %s18
          %p285 = scmp.lt.s32.totalorder %s284, 11
          %s286 = scalar_select %p285, %s284, 11
          %s287 = smul.addr %s286, 8
          %s288 = scalar_lea.vmem %s0, %s287
          %s289 = smul.u32 4, %s18
        $region52: #{tpu_custom_call.1} parent=47 // pred_fallthru
          _
      $region48: #{tpu_custom_call.1} parent=5 // pred_fallthru
        _
      %p290 = scmp.le.s32.totalorder 1, %s18
      %p291 = scmp.lt.s32.totalorder %s18, 4
      %p292 = pnand %p290, %p291
      %p293 = pneg %p292
      // Predicated region
      $region53: #{tpu_custom_call.1} parent=5 // pred_check
        _
      $region54: #{tpu_custom_call.1} parent=5 // pred_check_branch
        %295 = sbr.rel (%p292) target = $region56
      $region55: #{tpu_custom_call.1} parent=5 // pred_region
        %s296 = ssub.s32 %s18, 1
        %s297 = smul.u32 4, %s23
        %p298 = scmp.lt.s32.totalorder %s297, 11
        %s299 = scalar_select %p298, %s297, 11
        %s300 = smul.addr %s299, 8
        %s301 = scalar_lea.vmem %s0, %s300
        %p302 = pneg %p44
        %p303 = pneg %p41
        %p304 = pneg %p65
        %p305 = pneg %p62
        %p306 = pneg %p86
        %p307 = pneg %p83
        %p308 = pneg %p107
        %p309 = pneg %p104
        %p310 = pneg %p128
        %p311 = pneg %p125
        %p312 = pneg %p149
        %p313 = pneg %p146
        %p314 = pneg %p170
        %p315 = pneg %p167
        %p316 = pneg %p191
        %p317 = pneg %p188
        %p318 = pneg %p212
        %p319 = pneg %p209
        %p320 = pneg %p238
        %p321 = pneg %p235
        %s322 = sand.u32 %s225, 1
        %s323 = scalar_lea.sflag [#allocation3], %s322
        %s324 = sand.u32 %s225, 1
        %s325 = smul.addr %s324, 32
        %s326 = scalar_lea.vmem [#allocation2], %s325
        %s327 = smul.u32 4, %s23
        %p328 = scmp.lt.s32.totalorder %s327, 11
        %s329 = scalar_select %p328, %s327, 11
        %s330 = smul.addr %s329, 8
        %s331 = scalar_lea.vmem %s0, %s330
        %s332 = smul.u32 4, %s23
        %s333 = smul.u32 4, %s23
        %v335 = vld [vmem:[%s331] sm:$0xff]
        %v336 = vld [vmem:[%s331 + $0x8] sm:$0xff]
        %v337 = vld [vmem:[%s331 + $0x10] sm:$0xff]
        %v338 = vld [vmem:[%s331 + $0x18] sm:$0xff]
        %v339 = vpack.c.bf16 %v336, %v335
        %v340 = vpack.c.bf16 %v338, %v337
        %v341 = vld [vmem:[%s1] sm:$0xf]
        %v342 = vld [vmem:[%s1 + $0x4] sm:$0xf]
        %v343 = vld [vmem:[%s2] sm:$0x1]
        %v345 = vlaneseq
        %v346 = vshrl.u32 %v345, 7
        %v347 = vsub.s32 0, %v346
        %v348 = vrot.slane %v343, %v347
        %v352 = vunpack.c.l.b16 %v341
        %v353 = vunpack.c.l.b16 %v342
        %v354 = vpack.c.b16 %v353, %v352
        %vm356 = vcmask 130048
        %v358 = vsel %vm356, %v339, 0
        %v361 = vsel %vm356, %v340, 0
        %363 = vmatprep.subr.bf16.mxu0 0
        %364 = vmatpush1.bf16.msra.mxu0 0
        %365 = vmatprep.subr.bf16.mxu0 0
        %366 = vmatpush1.bf16.msra.mxu0 0
        %367 = vmatprep.subr.bf16.mxu0 0
        %368 = vmatpush1.bf16.msra.mxu0 0
        %369 = vmatprep.subr.bf16.mxu0 0
        %370 = vmatpush1.bf16.msra.mxu0 0
        %371 = vmatprep.subr.bf16.mxu0 0
        %372 = vmatpush1.bf16.msra.mxu0 0
        %373 = vmatprep.subr.bf16.mxu0 0
        %374 = vmatpush1.bf16.msra.mxu0 0
        %375 = vmatprep.subr.bf16.mxu0 0
        %376 = vmatpush1.bf16.msra.mxu0 0
        %377 = vmatprep.subr.bf16.mxu0 0
        %378 = vmatpush1.bf16.msra.mxu0 %v354
        %379 = vmatprep.subr.bf16.mxu0 0
        %380 = vmatpush2.bf16.msra.mxu0 0
        %381 = vmatprep.subr.bf16.mxu0 0
        %382 = vmatpush2.bf16.msra.mxu0 0
        %383 = vmatprep.subr.bf16.mxu0 0
        %384 = vmatpush2.bf16.msra.mxu0 0
        %385 = vmatprep.subr.bf16.mxu0 0
        %386 = vmatpush2.bf16.msra.mxu0 0
        %387 = vmatprep.subr.bf16.mxu0 0
        %388 = vmatpush2.bf16.msra.mxu0 0
        %389 = vmatprep.subr.bf16.mxu0 0
        %390 = vmatpush2.bf16.msra.mxu0 0
        %391 = vmatprep.subr.bf16.mxu0 0
        %392 = vmatpush2.bf16.msra.mxu0 0
        %393 = vmatprep.subr.bf16.mxu0 0
        %394 = vmatpush2.bf16.msra.mxu0 0
        %395 = vmatprep.mubr.bf16.mxu0 0
        %396 = vmatmul.mubr.bf16.gmra.mxu0 %v358
        %v397 = vpop.f32.mrf.mxu0
        %v398 = vadd.f32 %v348, %v397
        %v399 = vpop.f32.mrf.mxu0
        %v400 = vpop.f32.mrf.mxu0
        %v401 = vadd.f32 %v348, %v400
        %v402 = vpop.f32.mrf.mxu0
        %403 = vmatprep.mubr.bf16.mxu0 0
        %404 = vmatmul.mubr.bf16.gmra.mxu0 %v361
        %v405 = vpop.f32.mrf.mxu0
        %v406 = vadd.f32 %v348, %v405
        %v407 = vpop.f32.mrf.mxu0
        %v408 = vpop.f32.mrf.mxu0
        %v409 = vadd.f32 %v348, %v408
        %v410 = vpop.f32.mrf.mxu0
        %411 = vdwg.mxu0
        %v412 = vmax.f32 %v398, 0.0
        %v413 = vmax.f32 %v401, 0.0
        %v414 = vmax.f32 %v406, 0.0
        %v415 = vmax.f32 %v409, 0.0
        %v416 = vpack.c.bf16 %v413, %v412
        %v417 = vpack.c.bf16 %v415, %v414
        %v418 = vld [vmem:[%s3] sm:$0xf]
        %v419 = vld [vmem:[%s3 + $0x4] sm:$0xf]
        %v420 = vld [vmem:[%s3 + $0x8] sm:$0xf]
        %v421 = vld [vmem:[%s3 + $0xc] sm:$0xf]
        %v422 = vld [vmem:[%s3 + $0x10] sm:$0xf]
        %v423 = vld [vmem:[%s3 + $0x14] sm:$0xf]
        %v424 = vld [vmem:[%s3 + $0x18] sm:$0xf]
        %v425 = vld [vmem:[%s3 + $0x1c] sm:$0xf]
        %v426 = vld [vmem:[%s4] sm:$0x1]
        %v428 = vlaneseq
        %v429 = vshrl.u32 %v428, 7
        %v430 = vsub.s32 0, %v429
        %v431 = vrot.slane %v426, %v430
        %v441 = vunpack.c.l.b16 %v418
        %v442 = vunpack.c.l.b16 %v419
        %v443 = vunpack.c.l.b16 %v420
        %v444 = vunpack.c.l.b16 %v421
        %v445 = vunpack.c.l.b16 %v422
        %v446 = vunpack.c.l.b16 %v423
        %v447 = vunpack.c.l.b16 %v424
        %v448 = vunpack.c.l.b16 %v425
        %v449 = vpack.c.b16 %v442, %v441
        %v450 = vpack.c.b16 %v444, %v443
        %v451 = vpack.c.b16 %v446, %v445
        %v452 = vpack.c.b16 %v448, %v447
        %vm457 = vcmask 523264
        %v459 = vsel %vm457, %v416, 0
        %v462 = vsel %vm457, %v417, 0
        %464 = vmatprep.subr.bf16.mxu0 0
        %465 = vmatpush1.bf16.msra.mxu0 0
        %466 = vmatprep.subr.bf16.mxu0 0
        %467 = vmatpush1.bf16.msra.mxu0 0
        %468 = vmatprep.subr.bf16.mxu0 0
        %469 = vmatpush1.bf16.msra.mxu0 0
        %470 = vmatprep.subr.bf16.mxu0 0
        %471 = vmatpush1.bf16.msra.mxu0 0
        %472 = vmatprep.subr.bf16.mxu0 0
        %473 = vmatpush1.bf16.msra.mxu0 %v452
        %474 = vmatprep.subr.bf16.mxu0 0
        %475 = vmatpush1.bf16.msra.mxu0 %v451
        %476 = vmatprep.subr.bf16.mxu0 0
        %477 = vmatpush1.bf16.msra.mxu0 %v450
        %478 = vmatprep.subr.bf16.mxu0 0
        %479 = vmatpush1.bf16.msra.mxu0 %v449
        %480 = vmatprep.subr.bf16.mxu0 0
        %481 = vmatpush2.bf16.msra.mxu0 0
        %482 = vmatprep.subr.bf16.mxu0 0
        %483 = vmatpush2.bf16.msra.mxu0 0
        %484 = vmatprep.subr.bf16.mxu0 0
        %485 = vmatpush2.bf16.msra.mxu0 0
        %486 = vmatprep.subr.bf16.mxu0 0
        %487 = vmatpush2.bf16.msra.mxu0 0
        %488 = vmatprep.subr.bf16.mxu0 0
        %489 = vmatpush2.bf16.msra.mxu0 0
        %490 = vmatprep.subr.bf16.mxu0 0
        %491 = vmatpush2.bf16.msra.mxu0 0
        %492 = vmatprep.subr.bf16.mxu0 0
        %493 = vmatpush2.bf16.msra.mxu0 0
        %494 = vmatprep.subr.bf16.mxu0 0
        %495 = vmatpush2.bf16.msra.mxu0 0
        %496 = vmatprep.mubr.bf16.mxu0 0
        %497 = vmatmul.mubr.bf16.gmra.mxu0 %v459
        %v498 = vpop.f32.mrf.mxu0
        %v499 = vadd.f32 %v431, %v498
        %v500 = vpop.f32.mrf.mxu0
        %v501 = vpop.f32.mrf.mxu0
        %v502 = vadd.f32 %v431, %v501
        %v503 = vpop.f32.mrf.mxu0
        %504 = vmatprep.mubr.bf16.mxu0 0
        %505 = vmatmul.mubr.bf16.gmra.mxu0 %v462
        %v506 = vpop.f32.mrf.mxu0
        %v507 = vadd.f32 %v431, %v506
        %v508 = vpop.f32.mrf.mxu0
        %v509 = vpop.f32.mrf.mxu0
        %v510 = vadd.f32 %v431, %v509
        %v511 = vpop.f32.mrf.mxu0
        %512 = vdwg.mxu0
        %v513 = vmax.f32 %v499, 0.0
        %v514 = vmax.f32 %v502, 0.0
        %v515 = vmax.f32 %v507, 0.0
        %v516 = vmax.f32 %v510, 0.0
        %v517 = vpack.c.bf16 %v514, %v513
        %v518 = vpack.c.bf16 %v516, %v515
        %v519 = vld [vmem:[%s5] sm:$0xf]
        %v520 = vld [vmem:[%s5 + $0x4] sm:$0xf]
        %v521 = vld [vmem:[%s5 + $0x8] sm:$0xf]
        %v522 = vld [vmem:[%s5 + $0xc] sm:$0xf]
        %v523 = vld [vmem:[%s5 + $0x10] sm:$0xf]
        %v524 = vld [vmem:[%s5 + $0x14] sm:$0xf]
        %v525 = vld [vmem:[%s5 + $0x18] sm:$0xf]
        %v526 = vld [vmem:[%s5 + $0x1c] sm:$0xf]
        %v527 = vld [vmem:[%s5 + $0x20] sm:$0xf]
        %v528 = vld [vmem:[%s5 + $0x24] sm:$0xf]
        %v529 = vld [vmem:[%s5 + $0x28] sm:$0xf]
        %v530 = vld [vmem:[%s5 + $0x2c] sm:$0xf]
        %v531 = vld [vmem:[%s5 + $0x30] sm:$0xf]
        %v532 = vld [vmem:[%s5 + $0x34] sm:$0xf]
        %v533 = vld [vmem:[%s5 + $0x38] sm:$0xf]
        %v534 = vld [vmem:[%s5 + $0x3c] sm:$0xf]
        %v535 = vld [vmem:[%s6] sm:$0x1]
        %v537 = vlaneseq
        %v538 = vshrl.u32 %v537, 7
        %v539 = vsub.s32 0, %v538
        %v540 = vrot.slane %v535, %v539
        %v558 = vunpack.c.l.b16 %v519
        %v559 = vunpack.c.l.b16 %v520
        %v560 = vunpack.c.l.b16 %v521
        %v561 = vunpack.c.l.b16 %v522
        %v562 = vunpack.c.l.b16 %v523
        %v563 = vunpack.c.l.b16 %v524
        %v564 = vunpack.c.l.b16 %v525
        %v565 = vunpack.c.l.b16 %v526
        %v566 = vunpack.c.l.b16 %v527
        %v567 = vunpack.c.l.b16 %v528
        %v568 = vunpack.c.l.b16 %v529
        %v569 = vunpack.c.l.b16 %v530
        %v570 = vunpack.c.l.b16 %v531
        %v571 = vunpack.c.l.b16 %v532
        %v572 = vunpack.c.l.b16 %v533
        %v573 = vunpack.c.l.b16 %v534
        %v574 = vpack.c.b16 %v559, %v558
        %v575 = vpack.c.b16 %v561, %v560
        %v576 = vpack.c.b16 %v563, %v562
        %v577 = vpack.c.b16 %v565, %v564
        %v578 = vpack.c.b16 %v567, %v566
        %v579 = vpack.c.b16 %v569, %v568
        %v580 = vpack.c.b16 %v571, %v570
        %v581 = vpack.c.b16 %v573, %v572
        %590 = vmatprep.subr.bf16.mxu0 0
        %591 = vmatpush1.bf16.msra.mxu0 %v581
        %592 = vmatprep.subr.bf16.mxu0 0
        %593 = vmatpush1.bf16.msra.mxu0 %v580
        %594 = vmatprep.subr.bf16.mxu0 0
        %595 = vmatpush1.bf16.msra.mxu0 %v579
        %596 = vmatprep.subr.bf16.mxu0 0
        %597 = vmatpush1.bf16.msra.mxu0 %v578
        %598 = vmatprep.subr.bf16.mxu0 0
        %599 = vmatpush1.bf16.msra.mxu0 %v577
        %600 = vmatprep.subr.bf16.mxu0 0
        %601 = vmatpush1.bf16.msra.mxu0 %v576
        %602 = vmatprep.subr.bf16.mxu0 0
        %603 = vmatpush1.bf16.msra.mxu0 %v575
        %604 = vmatprep.subr.bf16.mxu0 0
        %605 = vmatpush1.bf16.msra.mxu0 %v574
        %606 = vmatprep.subr.bf16.mxu0 0
        %607 = vmatpush2.bf16.msra.mxu0 0
        %608 = vmatprep.subr.bf16.mxu0 0
        %609 = vmatpush2.bf16.msra.mxu0 0
        %610 = vmatprep.subr.bf16.mxu0 0
        %611 = vmatpush2.bf16.msra.mxu0 0
        %612 = vmatprep.subr.bf16.mxu0 0
        %613 = vmatpush2.bf16.msra.mxu0 0
        %614 = vmatprep.subr.bf16.mxu0 0
        %615 = vmatpush2.bf16.msra.mxu0 0
        %616 = vmatprep.subr.bf16.mxu0 0
        %617 = vmatpush2.bf16.msra.mxu0 0
        %618 = vmatprep.subr.bf16.mxu0 0
        %619 = vmatpush2.bf16.msra.mxu0 0
        %620 = vmatprep.subr.bf16.mxu0 0
        %621 = vmatpush2.bf16.msra.mxu0 0
        %622 = vmatprep.mubr.bf16.mxu0 0
        %623 = vmatmul.mubr.bf16.gmra.mxu0 %v517
        %v624 = vpop.f32.mrf.mxu0
        %v625 = vadd.f32 %v540, %v624
        %v626 = vpop.f32.mrf.mxu0
        %v627 = vpop.f32.mrf.mxu0
        %v628 = vadd.f32 %v540, %v627
        %v629 = vpop.f32.mrf.mxu0
        %630 = vmatprep.mubr.bf16.mxu0 0
        %631 = vmatmul.mubr.bf16.gmra.mxu0 %v518
        %v632 = vpop.f32.mrf.mxu0
        %v633 = vadd.f32 %v540, %v632
        %v634 = vpop.f32.mrf.mxu0
        %v635 = vpop.f32.mrf.mxu0
        %v636 = vadd.f32 %v540, %v635
        %v637 = vpop.f32.mrf.mxu0
        %638 = vdwg.mxu0
        %v639 = vmax.f32 %v625, 0.0
        %v640 = vmax.f32 %v628, 0.0
        %v641 = vmax.f32 %v633, 0.0
        %v642 = vmax.f32 %v636, 0.0
        %v643 = vpack.c.bf16 %v640, %v639
        %v644 = vpack.c.bf16 %v642, %v641
        %v645 = vld [vmem:[%s7] sm:$0xf]
        %v646 = vld [vmem:[%s7 + $0x4] sm:$0xf]
        %v647 = vld [vmem:[%s7 + $0x8] sm:$0xf]
        %v648 = vld [vmem:[%s7 + $0xc] sm:$0xf]
        %v649 = vld [vmem:[%s7 + $0x10] sm:$0xf]
        %v650 = vld [vmem:[%s7 + $0x14] sm:$0xf]
        %v651 = vld [vmem:[%s7 + $0x18] sm:$0xf]
        %v652 = vld [vmem:[%s7 + $0x1c] sm:$0xf]
        %v653 = vld [vmem:[%s8] sm:$0x1]
        %v655 = vlaneseq
        %v656 = vshrl.u32 %v655, 7
        %v657 = vsub.s32 0, %v656
        %v658 = vrot.slane %v653, %v657
        %v668 = vunpack.c.l.b16 %v645
        %v669 = vunpack.c.l.b16 %v646
        %v670 = vunpack.c.l.b16 %v647
        %v671 = vunpack.c.l.b16 %v648
        %v672 = vunpack.c.l.b16 %v649
        %v673 = vunpack.c.l.b16 %v650
        %v674 = vunpack.c.l.b16 %v651
        %v675 = vunpack.c.l.b16 %v652
        %v676 = vpack.c.b16 %v669, %v668
        %v677 = vpack.c.b16 %v671, %v670
        %v678 = vpack.c.b16 %v673, %v672
        %v679 = vpack.c.b16 %v675, %v674
        %v685 = vsel %vm457, %v643, 0
        %v688 = vsel %vm457, %v644, 0
        %690 = vmatprep.subr.bf16.mxu0 0
        %691 = vmatpush1.bf16.msra.mxu0 0
        %692 = vmatprep.subr.bf16.mxu0 0
        %693 = vmatpush1.bf16.msra.mxu0 0
        %694 = vmatprep.subr.bf16.mxu0 0
        %695 = vmatpush1.bf16.msra.mxu0 0
        %696 = vmatprep.subr.bf16.mxu0 0
        %697 = vmatpush1.bf16.msra.mxu0 0
        %698 = vmatprep.subr.bf16.mxu0 0
        %699 = vmatpush1.bf16.msra.mxu0 %v679
        %700 = vmatprep.subr.bf16.mxu0 0
        %701 = vmatpush1.bf16.msra.mxu0 %v678
        %702 = vmatprep.subr.bf16.mxu0 0
        %703 = vmatpush1.bf16.msra.mxu0 %v677
        %704 = vmatprep.subr.bf16.mxu0 0
        %705 = vmatpush1.bf16.msra.mxu0 %v676
        %706 = vmatprep.subr.bf16.mxu0 0
        %707 = vmatpush2.bf16.msra.mxu0 0
        %708 = vmatprep.subr.bf16.mxu0 0
        %709 = vmatpush2.bf16.msra.mxu0 0
        %710 = vmatprep.subr.bf16.mxu0 0
        %711 = vmatpush2.bf16.msra.mxu0 0
        %712 = vmatprep.subr.bf16.mxu0 0
        %713 = vmatpush2.bf16.msra.mxu0 0
        %714 = vmatprep.subr.bf16.mxu0 0
        %715 = vmatpush2.bf16.msra.mxu0 0
        %716 = vmatprep.subr.bf16.mxu0 0
        %717 = vmatpush2.bf16.msra.mxu0 0
        %718 = vmatprep.subr.bf16.mxu0 0
        %719 = vmatpush2.bf16.msra.mxu0 0
        %720 = vmatprep.subr.bf16.mxu0 0
        %721 = vmatpush2.bf16.msra.mxu0 0
        %722 = vmatprep.mubr.bf16.mxu0 0
        %723 = vmatmul.mubr.bf16.gmra.mxu0 %v685
        %v724 = vpop.f32.mrf.mxu0
        %v725 = vadd.f32 %v658, %v724
        %v726 = vpop.f32.mrf.mxu0
        %v727 = vpop.f32.mrf.mxu0
        %v728 = vadd.f32 %v658, %v727
        %v729 = vpop.f32.mrf.mxu0
        %730 = vmatprep.mubr.bf16.mxu0 0
        %731 = vmatmul.mubr.bf16.gmra.mxu0 %v688
        %v732 = vpop.f32.mrf.mxu0
        %v733 = vadd.f32 %v658, %v732
        %v734 = vpop.f32.mrf.mxu0
        %v735 = vpop.f32.mrf.mxu0
        %v736 = vadd.f32 %v658, %v735
        %v737 = vpop.f32.mrf.mxu0
        %738 = vdwg.mxu0
        %v739 = vtanh.pop %v725
        %v740 = vtanh.pop %v728
        %v741 = vtanh.pop %v733
        %v742 = vtanh.pop %v736
        %743 = vst [vmem:[%s326] sm:$0xff] %v739
        %744 = vst [vmem:[%s326 + $0x8] sm:$0xff] %v740
        %745 = vst [vmem:[%s326 + $0x10] sm:$0xff] %v741
        %746 = vst [vmem:[%s326 + $0x18] sm:$0xff] %v742
        %s747 = sand.u32 %s225, 1
        %s748 = scalar_lea.sflag [#allocation3], %s747
        %s749 = sand.u32 %s225, 1
        %s750 = smul.addr %s749, 32
        %s751 = scalar_lea.vmem [#allocation2], %s750
        // Predicated region
        $region57: #{tpu_custom_call.1} parent=55 // pred_check
          %p752 = pneg %p235
        $region58: #{tpu_custom_call.1} parent=55 // pred_check_branch
          %754 = sbr.rel (%p752) target = $region60
        $region59: #{tpu_custom_call.1} parent=55 // pred_region
          %s755 = smul.u32 4, %s23
          %s757 = ssub.s32 512, 512
          %758 = vsyncadd %s748, %s757
          %s759 = smul.addr %s755, 128
          %s760 = scalar_lea.hbm %s9, %s759
          %s761 = sshll.u32 %s751, 4
          %s762 = int_to_ptr.vmem [resolvable:$true] %s761
          %767 = dma.vmem_to_hbm [thread:$0]  %s762, 512, %s760, %s748, 128, 128, 8
        $region60: #{tpu_custom_call.1} parent=55 // pred_fallthru
          _
      $region56: #{tpu_custom_call.1} parent=5 // pred_fallthru
        _
      %p768 = scmp.le.s32.totalorder 2, %s18
      // Predicated region
      $region61: #{tpu_custom_call.1} parent=5 // pred_check
        %p769 = pneg %p768
      $region62: #{tpu_custom_call.1} parent=5 // pred_check_branch
        %771 = sbr.rel (%p769) target = $region64
      $region63: #{tpu_custom_call.1} parent=5 // pred_region
        %s772 = ssub.s32 %s18, 2
        // Predicated region
        $region65: #{tpu_custom_call.1} parent=63 // pred_check
          %p773 = pneg %p241
        $region66: #{tpu_custom_call.1} parent=63 // pred_check_branch
          %775 = sbr.rel (%p773) target = $region68
        $region67: #{tpu_custom_call.1} parent=63 // pred_region
          %s776 = sand.u32 %s226, 1
          %s777 = scalar_lea.sflag [#allocation3], %s776
          %s778 = sand.u32 %s226, 1
          %s779 = smul.addr %s778, 32
          %s780 = scalar_lea.vmem [#allocation2], %s779
          %781 = dma.done %s777, 512
        $region68: #{tpu_custom_call.1} parent=63 // pred_fallthru
          _
      $region64: #{tpu_custom_call.1} parent=5 // pred_fallthru
        _
    $region6: #{tpu_custom_call.1} parent=1 // loop_footer
      %s22 = sadd.s32 1, %s18
    $region7: #{tpu_custom_call.1} parent=1 // loop_footer_branch
      %17 = sbr.rel target = $region3
    $region8: #{tpu_custom_call.1} parent=1 // loop_exit
      _
    %782 = vsyncpa [#allocation3], 1
    %s783 = scalar_lea.sflag [#allocation3], 1
    %784 = vsyncpa %s783, 1

</llo_original>
